<compile_context>
chip_gen: v7x
topology: tpu7x:2x2x1
jax: 0.10.0
libtpu: 0.0.40
codegen_flags: <defaults>
</compile_context>

<pallas_src>
import jax
import jax.numpy as jnp
from jax.experimental import pallas as pl
from jax.experimental.pallas import tpu as pltpu


def _ncf_mlp_kernel(ue_ref, ie_ref,
                    w1u_ref, w1i_ref, b1_ref,
                    w2_ref, b2_ref,
                    w3_ref, b3_ref,
                    w4_ref, b4_ref,
                    o_ref):
    # ue_ref / ie_ref: [L, TB] feature-major tiles of the user/item embeddings.
    ue = ue_ref[...]
    ie = ie_ref[...]

    # l1 on the (never-materialized) concat: split-K over the two halves of w1.
    h = (jnp.dot(w1u_ref[...], ue, preferred_element_type=jnp.float32)
         + jnp.dot(w1i_ref[...], ie, preferred_element_type=jnp.float32)
         + b1_ref[...])                                                 # [32, TB]
    h = jnp.maximum(h, 0.0)                                             # ReLU

    h = jnp.dot(w2_ref[...], h, preferred_element_type=jnp.float32) + b2_ref[...]  # [16, TB]
    h = jnp.maximum(h, 0.0)                                             # ReLU

    h = jnp.dot(w3_ref[...], h, preferred_element_type=jnp.float32) + b3_ref[...]  # [8, TB]
    h = jnp.maximum(h, 0.0)                                             # ReLU (top_depth == 0 path)

    # l4: 8 -> 1 as broadcast-mul + sublane reduce (avoids an M=1 MXU pass).
    logits = jnp.sum(h * w4_ref[...], axis=0, keepdims=True) + b4_ref[...]          # [1, TB]
    o_ref[...] = jax.nn.sigmoid(logits)
    # TODO(synk): top_depth == 1 / 2 early-exit variants are not implemented
    # (default top_depth == 0 forward only).


def _round_up(x, m):
    return ((x + m - 1) // m) * m


def ncf_mlp_forward(user, items, params, *, tb=1024):
    """user: [B] int32, items: [B] int32 -> [B, 1] float32 probabilities."""
    B = user.shape[0]
    L = params["embed_users"].shape[1]

    # Batch tile on the lane axis: multiple of 128, capped near `tb` / B.
    TB = max(128, min(_round_up(tb, 128), _round_up(B, 128)))
    B_pad = _round_up(B, TB)
    if B_pad != B:
        pad = B_pad - B
        user = jnp.pad(user, (0, pad))     # index 0 is always valid
        items = jnp.pad(items, (0, pad))

    # Embedding gathers stay in plain JAX (glue); tables are transposed (they
    # are tiny compared to the activations) so the gathered activations land
    # directly in feature-major [L, B] layout -- no [B, L] -> [L, B] transpose
    # of the big tensor is ever needed.
    # TODO(synk): fuse the gather into the kernel (PrefetchScalarGridSpec +
    # manual DMA) if the embedding tables / gather ever dominate.
    ue_t = jnp.take(params["embed_users"].T, user, axis=1)    # [L, B_pad]
    ie_t = jnp.take(params["embed_items"].T, items, axis=1)   # [L, B_pad]

    w1u_t = params["w1"][:L].T     # [32, L]   acts on user embed
    w1i_t = params["w1"][L:].T     # [32, L]   acts on item embed
    b1_t = params["b1"].T          # [32, 1]
    w2_t = params["w2"].T          # [16, 32]
    b2_t = params["b2"].T          # [16, 1]
    w3_t = params["w3"].T          # [8, 16]
    b3_t = params["b3"].T          # [8, 1]
    w4_c = params["w4"]            # [8, 1]    used as a column for the reduce
    b4_t = params["b4"].T          # [1, 1]

    grid = (B_pad // TB,)
    const = lambda i: (0, 0)       # resident (non-streamed) operands

    out = pl.pallas_call(
        _ncf_mlp_kernel,
        out_shape=jax.ShapeDtypeStruct((1, B_pad), jnp.float32),
        grid=grid,
        in_specs=[
            pl.BlockSpec((L, TB), lambda i: (0, i)),   # user embeddings tile
            pl.BlockSpec((L, TB), lambda i: (0, i)),   # item embeddings tile
            pl.BlockSpec((32, L), const),              # w1 (top half, transposed)
            pl.BlockSpec((32, L), const),              # w1 (bottom half, transposed)
            pl.BlockSpec((32, 1), const),              # b1
            pl.BlockSpec((16, 32), const),             # w2
            pl.BlockSpec((16, 1), const),              # b2
            pl.BlockSpec((8, 16), const),              # w3
            pl.BlockSpec((8, 1), const),               # b3
            pl.BlockSpec((8, 1), const),               # w4 (column)
            pl.BlockSpec((1, 1), const),               # b4
        ],
        out_specs=pl.BlockSpec((1, TB), lambda i: (0, i)),
        compiler_params=pltpu.CompilerParams(
            dimension_semantics=("parallel",)),
    )(
        ue_t, ie_t,
        w1u_t, w1i_t, b1_t,
        w2_t, b2_t,
        w3_t, b3_t,
        w4_c, b4_t,
    )
    return out.reshape(B_pad, 1)[:B]


def init_params(key, num_users, num_items, latent_dims):
    ks = jax.random.split(key, 10)

    def linear_init(kw, kb, fan_in, fan_out):
        bound = 1.0 / jnp.sqrt(fan_in)
        w = jax.random.uniform(kw, (fan_in, fan_out), jnp.float32, -bound, bound)
        b = jax.random.uniform(kb, (1, fan_out), jnp.float32, -bound, bound)
        return w, b

    w1, b1 = linear_init(ks[2], ks[3], 2 * latent_dims, 32)
    w2, b2 = linear_init(ks[4], ks[5], 32, 16)
    w3, b3 = linear_init(ks[6], ks[7], 16, 8)
    w4, b4 = linear_init(ks[8], ks[9], 8, 1)

    return {
        # nn.Embedding default init: N(0, 1)
        "embed_users": jax.random.normal(ks[0], (num_users, latent_dims), jnp.float32),
        "embed_items": jax.random.normal(ks[1], (num_items, latent_dims), jnp.float32),
        "w1": w1, "b1": b1,
        "w2": w2, "b2": b2,
        "w3": w3, "b3": b3,
        "w4": w4, "b4": b4,
    }


def _reference_forward(user, items, params):
    ue = jnp.take(params["embed_users"], user, axis=0)
    ie = jnp.take(params["embed_items"], items, axis=0)
    x = jnp.concatenate([ue, ie], axis=1)
    x = jnp.maximum(x @ params["w1"] + params["b1"], 0.0)
    x = jnp.maximum(x @ params["w2"] + params["b2"], 0.0)
    x = jnp.maximum(x @ params["w3"] + params["b3"], 0.0)
    return jax.nn.sigmoid(x @ params["w4"] + params["b4"])


if __name__ == "__main__":
    num_users, num_items, latent_dims = 10, 20, 16

    key = jax.random.PRNGKey(0)
    k_params, k_user, k_item = jax.random.split(key, 3)
    params = init_params(k_params, num_users, num_items, latent_dims)

    # Test 1: small batch (single tile, padded 8 -> 128 internally).
    batch = 8
    user = jax.random.randint(k_user, (batch,), 0, num_users, dtype=jnp.int32)
    items = jax.random.randint(k_item, (batch,), 0, num_items, dtype=jnp.int32)

    out = jax.block_until_ready(ncf_mlp_forward(user, items, params))
    ref = jax.block_until_ready(_reference_forward(user, items, params))
    assert out.shape == (batch, 1)
    assert jnp.allclose(out, ref, atol=1e-5, rtol=1e-5)

    # Test 2: ragged batch with a multi-step parallel grid (exercises padding,
    # resident weights across grid steps, and the tile pipeline).
    batch2 = 300
    k_user2, k_item2 = jax.random.split(jax.random.PRNGKey(1))
    user2 = jax.random.randint(k_user2, (batch2,), 0, num_users, dtype=jnp.int32)
    items2 = jax.random.randint(k_item2, (batch2,), 0, num_items, dtype=jnp.int32)

    out2 = jax.block_until_ready(ncf_mlp_forward(user2, items2, params, tb=128))
    ref2 = jax.block_until_ready(_reference_forward(user2, items2, params))
    assert out2.shape == (batch2, 1)
    assert jnp.allclose(out2, ref2, atol=1e-5, rtol=1e-5)

    print("KERNEL_OK")
</pallas_src>

<mosaic_0001>
module attributes {stable_mosaic.version = 11 : i64} {
  func.func @_ncf_mlp_kernel(%arg0: i32, %arg1: memref<16x128xf32, #tpu.memory_space<vmem>>, %arg2: memref<16x128xf32, #tpu.memory_space<vmem>>, %arg3: memref<32x16xf32, #tpu.memory_space<vmem>>, %arg4: memref<32x16xf32, #tpu.memory_space<vmem>>, %arg5: memref<32x1xf32, #tpu.memory_space<vmem>>, %arg6: memref<16x32xf32, #tpu.memory_space<vmem>>, %arg7: memref<16x1xf32, #tpu.memory_space<vmem>>, %arg8: memref<8x16xf32, #tpu.memory_space<vmem>>, %arg9: memref<8x1xf32, #tpu.memory_space<vmem>>, %arg10: memref<8x1xf32, #tpu.memory_space<vmem>>, %arg11: memref<1x1xf32, #tpu.memory_space<vmem>>, %arg12: memref<1x128xf32, #tpu.memory_space<vmem>>) attributes {dimension_semantics = [#tpu.dimension_semantics<parallel>], iteration_bounds = array<i64: 1>, scalar_prefetch = 0 : i64, scratch_operands = 0 : i64, tpu.core_type = #tpu.core_type<tc>, window_params = [{transform_indices = @transform_0, window_bounds = array<i64: 16, 128>}, {transform_indices = @transform_1, window_bounds = array<i64: 16, 128>}, {pipeline_mode = #tpu.pipeline_mode<synchronous>, transform_indices = @transform_2, window_bounds = array<i64: 32, 16>}, {pipeline_mode = #tpu.pipeline_mode<synchronous>, transform_indices = @transform_3, window_bounds = array<i64: 32, 16>}, {pipeline_mode = #tpu.pipeline_mode<synchronous>, transform_indices = @transform_4, window_bounds = array<i64: 32, 1>}, {pipeline_mode = #tpu.pipeline_mode<synchronous>, transform_indices = @transform_5, window_bounds = array<i64: 16, 32>}, {pipeline_mode = #tpu.pipeline_mode<synchronous>, transform_indices = @transform_6, window_bounds = array<i64: 16, 1>}, {pipeline_mode = #tpu.pipeline_mode<synchronous>, transform_indices = @transform_7, window_bounds = array<i64: 8, 16>}, {pipeline_mode = #tpu.pipeline_mode<synchronous>, transform_indices = @transform_8, window_bounds = array<i64: 8, 1>}, {pipeline_mode = #tpu.pipeline_mode<synchronous>, transform_indices = @transform_9, window_bounds = array<i64: 8, 1>}, {pipeline_mode = #tpu.pipeline_mode<synchronous>, transform_indices = @transform_10, window_bounds = array<i64: 1, 1>}, {transform_indices = @transform_11, window_bounds = array<i64: 1, 128>}]} {
    %c0 = arith.constant 0 : index
    %c0_0 = arith.constant 0 : index
    %0 = vector.load %arg1[%c0, %c0_0] : memref<16x128xf32, #tpu.memory_space<vmem>>, vector<16x128xf32>
    %c0_1 = arith.constant 0 : index
    %c0_2 = arith.constant 0 : index
    %1 = vector.load %arg2[%c0_1, %c0_2] : memref<16x128xf32, #tpu.memory_space<vmem>>, vector<16x128xf32>
    %c0_3 = arith.constant 0 : index
    %c0_4 = arith.constant 0 : index
    %2 = vector.load %arg3[%c0_3, %c0_4] : memref<32x16xf32, #tpu.memory_space<vmem>>, vector<32x16xf32>
    %cst = arith.constant dense<0.000000e+00> : vector<32x128xf32>
    %3 = tpu.matmul %2, %0, %cst {dimension_numbers = #tpu.dot_dimension_numbers<[1], [0], [0], [1], [0, 0, 1, 1], [], []>} : vector<32x16xf32>, vector<16x128xf32>, vector<32x128xf32> -> vector<32x128xf32>
    %c0_5 = arith.constant 0 : index
    %c0_6 = arith.constant 0 : index
    %4 = vector.load %arg4[%c0_5, %c0_6] : memref<32x16xf32, #tpu.memory_space<vmem>>, vector<32x16xf32>
    %cst_7 = arith.constant dense<0.000000e+00> : vector<32x128xf32>
    %5 = tpu.matmul %4, %1, %cst_7 {dimension_numbers = #tpu.dot_dimension_numbers<[1], [0], [0], [1], [0, 0, 1, 1], [], []>} : vector<32x16xf32>, vector<16x128xf32>, vector<32x128xf32> -> vector<32x128xf32>
    %6 = arith.addf %3, %5 : vector<32x128xf32>
    %c0_8 = arith.constant 0 : index
    %c0_9 = arith.constant 0 : index
    %7 = vector.load %arg5[%c0_8, %c0_9] : memref<32x1xf32, #tpu.memory_space<vmem>>, vector<32x1xf32>
    %8 = vector.broadcast %7 : vector<32x1xf32> to vector<32x128xf32>
    %9 = arith.addf %6, %8 : vector<32x128xf32>
    %cst_10 = arith.constant 0.000000e+00 : f32
    %10 = vector.broadcast %cst_10 : f32 to vector<32x128xf32>
    %11 = arith.maximumf %9, %10 : vector<32x128xf32>
    %c0_11 = arith.constant 0 : index
    %c0_12 = arith.constant 0 : index
    %12 = vector.load %arg6[%c0_11, %c0_12] : memref<16x32xf32, #tpu.memory_space<vmem>>, vector<16x32xf32>
    %cst_13 = arith.constant dense<0.000000e+00> : vector<16x128xf32>
    %13 = tpu.matmul %12, %11, %cst_13 {dimension_numbers = #tpu.dot_dimension_numbers<[1], [0], [0], [1], [0, 0, 1, 1], [], []>} : vector<16x32xf32>, vector<32x128xf32>, vector<16x128xf32> -> vector<16x128xf32>
    %c0_14 = arith.constant 0 : index
    %c0_15 = arith.constant 0 : index
    %14 = vector.load %arg7[%c0_14, %c0_15] : memref<16x1xf32, #tpu.memory_space<vmem>>, vector<16x1xf32>
    %15 = vector.broadcast %14 : vector<16x1xf32> to vector<16x128xf32>
    %16 = arith.addf %13, %15 : vector<16x128xf32>
    %cst_16 = arith.constant 0.000000e+00 : f32
    %17 = vector.broadcast %cst_16 : f32 to vector<16x128xf32>
    %18 = arith.maximumf %16, %17 : vector<16x128xf32>
    %c0_17 = arith.constant 0 : index
    %c0_18 = arith.constant 0 : index
    %19 = vector.load %arg8[%c0_17, %c0_18] : memref<8x16xf32, #tpu.memory_space<vmem>>, vector<8x16xf32>
    %cst_19 = arith.constant dense<0.000000e+00> : vector<8x128xf32>
    %20 = tpu.matmul %19, %18, %cst_19 {dimension_numbers = #tpu.dot_dimension_numbers<[1], [0], [0], [1], [0, 0, 1, 1], [], []>} : vector<8x16xf32>, vector<16x128xf32>, vector<8x128xf32> -> vector<8x128xf32>
    %c0_20 = arith.constant 0 : index
    %c0_21 = arith.constant 0 : index
    %21 = vector.load %arg9[%c0_20, %c0_21] : memref<8x1xf32, #tpu.memory_space<vmem>>, vector<8x1xf32>
    %22 = vector.broadcast %21 : vector<8x1xf32> to vector<8x128xf32>
    %23 = arith.addf %20, %22 : vector<8x128xf32>
    %cst_22 = arith.constant 0.000000e+00 : f32
    %24 = vector.broadcast %cst_22 : f32 to vector<8x128xf32>
    %25 = arith.maximumf %23, %24 : vector<8x128xf32>
    %c0_23 = arith.constant 0 : index
    %c0_24 = arith.constant 0 : index
    %26 = vector.load %arg10[%c0_23, %c0_24] : memref<8x1xf32, #tpu.memory_space<vmem>>, vector<8x1xf32>
    %27 = vector.broadcast %26 : vector<8x1xf32> to vector<8x128xf32>
    %28 = arith.mulf %25, %27 : vector<8x128xf32>
    %cst_25 = arith.constant dense<0.000000e+00> : vector<128xf32>
    %29 = vector.multi_reduction <add>, %28, %cst_25 [0] : vector<8x128xf32> to vector<128xf32>
    %30 = vector.shape_cast %29 : vector<128xf32> to vector<1x128xf32>
    %c0_26 = arith.constant 0 : index
    %c0_27 = arith.constant 0 : index
    %31 = vector.load %arg11[%c0_26, %c0_27] : memref<1x1xf32, #tpu.memory_space<vmem>>, vector<1x1xf32>
    %32 = vector.broadcast %31 : vector<1x1xf32> to vector<1x128xf32>
    %33 = arith.addf %30, %32 : vector<1x128xf32>
    %34 = arith.negf %33 : vector<1x128xf32>
    %35 = math.exp %34 : vector<1x128xf32>
    %cst_28 = arith.constant 1.000000e+00 : f32
    %36 = vector.broadcast %cst_28 : f32 to vector<1x128xf32>
    %37 = arith.addf %36, %35 : vector<1x128xf32>
    %38 = arith.divf %36, %37 : vector<1x128xf32>
    %c0_29 = arith.constant 0 : index
    %c0_30 = arith.constant 0 : index
    %39 = vector.load %arg12[%c0_29, %c0_30] : memref<1x128xf32, #tpu.memory_space<vmem>>, vector<1x128xf32>
    tpu.vector_store %arg12[%c0_29, %c0_30], %38 {strides = array<i32>} : memref<1x128xf32, #tpu.memory_space<vmem>>, vector<1x128xf32>,
    return
  }
  func.func @transform_0(%arg0: i32) -> (i32, i32) {
    %c0_i32 = arith.constant 0 : i32
    %c0_i32_0 = arith.constant 0 : i32
    return %c0_i32, %arg0 : i32, i32
  }
  func.func @transform_1(%arg0: i32) -> (i32, i32) {
    %c0_i32 = arith.constant 0 : i32
    %c0_i32_0 = arith.constant 0 : i32
    return %c0_i32, %arg0 : i32, i32
  }
  func.func @transform_2(%arg0: i32) -> (i32, i32) {
    %c0_i32 = arith.constant 0 : i32
    %c0_i32_0 = arith.constant 0 : i32
    %c0_i32_1 = arith.constant 0 : i32
    return %c0_i32, %c0_i32_0 : i32, i32
  }
  func.func @transform_3(%arg0: i32) -> (i32, i32) {
    %c0_i32 = arith.constant 0 : i32
    %c0_i32_0 = arith.constant 0 : i32
    %c0_i32_1 = arith.constant 0 : i32
    return %c0_i32, %c0_i32_0 : i32, i32
  }
  func.func @transform_4(%arg0: i32) -> (i32, i32) {
    %c0_i32 = arith.constant 0 : i32
    %c0_i32_0 = arith.constant 0 : i32
    %c0_i32_1 = arith.constant 0 : i32
    return %c0_i32, %c0_i32_0 : i32, i32
  }
  func.func @transform_5(%arg0: i32) -> (i32, i32) {
    %c0_i32 = arith.constant 0 : i32
    %c0_i32_0 = arith.constant 0 : i32
    %c0_i32_1 = arith.constant 0 : i32
    return %c0_i32, %c0_i32_0 : i32, i32
  }
  func.func @transform_6(%arg0: i32) -> (i32, i32) {
    %c0_i32 = arith.constant 0 : i32
    %c0_i32_0 = arith.constant 0 : i32
    %c0_i32_1 = arith.constant 0 : i32
    return %c0_i32, %c0_i32_0 : i32, i32
  }
  func.func @transform_7(%arg0: i32) -> (i32, i32) {
    %c0_i32 = arith.constant 0 : i32
    %c0_i32_0 = arith.constant 0 : i32
    %c0_i32_1 = arith.constant 0 : i32
    return %c0_i32, %c0_i32_0 : i32, i32
  }
  func.func @transform_8(%arg0: i32) -> (i32, i32) {
    %c0_i32 = arith.constant 0 : i32
    %c0_i32_0 = arith.constant 0 : i32
    %c0_i32_1 = arith.constant 0 : i32
    return %c0_i32, %c0_i32_0 : i32, i32
  }
  func.func @transform_9(%arg0: i32) -> (i32, i32) {
    %c0_i32 = arith.constant 0 : i32
    %c0_i32_0 = arith.constant 0 : i32
    %c0_i32_1 = arith.constant 0 : i32
    return %c0_i32, %c0_i32_0 : i32, i32
  }
  func.func @transform_10(%arg0: i32) -> (i32, i32) {
    %c0_i32 = arith.constant 0 : i32
    %c0_i32_0 = arith.constant 0 : i32
    %c0_i32_1 = arith.constant 0 : i32
    return %c0_i32, %c0_i32_0 : i32, i32
  }
  func.func @transform_11(%arg0: i32) -> (i32, i32) {
    %c0_i32 = arith.constant 0 : i32
    %c0_i32_0 = arith.constant 0 : i32
    return %c0_i32, %arg0 : i32, i32
  }
}

</mosaic_0001>

<llo_original>
// kernel: tpu_custom_call.1
$region0: #{tpu_custom_call.1}
  #allocation0 [shape = 'u32[]', space=smem, size = 0x4, offset = 0x4, fixed_abs, tag = 'smem constant byte address 0x4 - core index']
  #allocation1 [shape = 'u32[144,128]{1,0:T(1,128)}', space=vmem, size = 0x12000, scoped, tag = 'internal scratch']
  #allocation2 [shape = 'f32[1,1]{1,0:T(1,128)S(1)}', space=vmem, size = 0x200, scoped, tag = 'scoped memory for tpu_custom_call.1']
  %s0 = inlined_call_operand.vmem [shape: f32[16,128], index: 0, kind: input, shape index: {}]
  %s1 = inlined_call_operand.vmem [shape: f32[16,128], index: 1, kind: input, shape index: {}]
  %s2 = inlined_call_operand.vmem [shape: f32[32,16], index: 2, kind: input, shape index: {}]
  %s3 = inlined_call_operand.vmem [shape: f32[32,16], index: 3, kind: input, shape index: {}]
  %s4 = inlined_call_operand.vmem [shape: f32[32,1], index: 4, kind: input, shape index: {}]
  %s5 = inlined_call_operand.vmem [shape: f32[16,32], index: 5, kind: input, shape index: {}]
  %s6 = inlined_call_operand.vmem [shape: f32[16,1], index: 6, kind: input, shape index: {}]
  %s7 = inlined_call_operand.vmem [shape: f32[8,16], index: 7, kind: input, shape index: {}]
  %s8 = inlined_call_operand.vmem [shape: f32[8,1], index: 8, kind: input, shape index: {}]
  %s9 = inlined_call_operand.vmem [shape: f32[8,1], index: 9, kind: input, shape index: {}]
  %s10 = inlined_call_operand.<no memory space> [shape: f32[1,1], index: 10, kind: input, shape index: {}]
  %s11 = inlined_call_operand.hbm [shape: f32[1,128], index: 11, kind: output, shape index: {}]
  %s12 = sld [smem:[#allocation0]]
  $region54: #{tpu_custom_call.1} parent=0
    _
  %s14 = ssub.s32 1, %s12
  %s15 = scalar_select 0, %s14, %s12
  %v16 = vstv %s10
  %17 = vst [vmem:[#allocation2] sm:$0x1] %v16
  $region1: #{tpu_custom_call.1} parent=0
    #allocation3 [shape = 'u8[512]{0}', space=vmem, size = 0x400, scoped, tag = 'output window, operand 0, single buffered']
    #allocation4 [shape = 's32[1]{0}', space=sflag, size = 0x4, scoped, tag = 'scoped memory for tpu_custom_call.1']
    %18 = vsyncpa [#allocation4], 0
    // Predicated region
    $region2: #{tpu_custom_call.1} parent=1 // pred_check
      _
    $region3: #{tpu_custom_call.1} parent=1 // pred_check_branch
      %20 = sbr.rel (0) target = $region5
    $region4: #{tpu_custom_call.1} parent=1 // pred_region
      _
    $region5: #{tpu_custom_call.1} parent=1 // pred_fallthru
      _
    // Predicated region
    $region6: #{tpu_custom_call.1} parent=1 // pred_check
      _
    $region7: #{tpu_custom_call.1} parent=1 // pred_check_branch
      %22 = sbr.rel (0) target = $region9
    $region8: #{tpu_custom_call.1} parent=1 // pred_region
      _
    $region9: #{tpu_custom_call.1} parent=1 // pred_fallthru
      _
    // Predicated region
    $region10: #{tpu_custom_call.1} parent=1 // pred_check
      _
    $region11: #{tpu_custom_call.1} parent=1 // pred_check_branch
      %24 = sbr.rel (0) target = $region13
    $region12: #{tpu_custom_call.1} parent=1 // pred_region
      _
    $region13: #{tpu_custom_call.1} parent=1 // pred_fallthru
      _
    // Predicated region
    $region14: #{tpu_custom_call.1} parent=1 // pred_check
      _
    $region15: #{tpu_custom_call.1} parent=1 // pred_check_branch
      %26 = sbr.rel (0) target = $region17
    $region16: #{tpu_custom_call.1} parent=1 // pred_region
      _
    $region17: #{tpu_custom_call.1} parent=1 // pred_fallthru
      _
    // Predicated region
    $region18: #{tpu_custom_call.1} parent=1 // pred_check
      _
    $region19: #{tpu_custom_call.1} parent=1 // pred_check_branch
      %28 = sbr.rel (0) target = $region21
    $region20: #{tpu_custom_call.1} parent=1 // pred_region
      _
    $region21: #{tpu_custom_call.1} parent=1 // pred_fallthru
      _
    // Predicated region
    $region22: #{tpu_custom_call.1} parent=1 // pred_check
      _
    $region23: #{tpu_custom_call.1} parent=1 // pred_check_branch
      %30 = sbr.rel (0) target = $region25
    $region24: #{tpu_custom_call.1} parent=1 // pred_region
      _
    $region25: #{tpu_custom_call.1} parent=1 // pred_fallthru
      _
    // Predicated region
    $region26: #{tpu_custom_call.1} parent=1 // pred_check
      _
    $region27: #{tpu_custom_call.1} parent=1 // pred_check_branch
      %32 = sbr.rel (0) target = $region29
    $region28: #{tpu_custom_call.1} parent=1 // pred_region
      _
    $region29: #{tpu_custom_call.1} parent=1 // pred_fallthru
      _
    // Predicated region
    $region30: #{tpu_custom_call.1} parent=1 // pred_check
      _
    $region31: #{tpu_custom_call.1} parent=1 // pred_check_branch
      %34 = sbr.rel (0) target = $region33
    $region32: #{tpu_custom_call.1} parent=1 // pred_region
      _
    $region33: #{tpu_custom_call.1} parent=1 // pred_fallthru
      _
    // Predicated region
    $region34: #{tpu_custom_call.1} parent=1 // pred_check
      _
    $region35: #{tpu_custom_call.1} parent=1 // pred_check_branch
      %36 = sbr.rel (0) target = $region37
    $region36: #{tpu_custom_call.1} parent=1 // pred_region
      _
    $region37: #{tpu_custom_call.1} parent=1 // pred_fallthru
      _
    // Predicated region
    $region38: #{tpu_custom_call.1} parent=1 // pred_check
      _
    $region39: #{tpu_custom_call.1} parent=1 // pred_check_branch
      %38 = sbr.rel (0) target = $region41
    $region40: #{tpu_custom_call.1} parent=1 // pred_region
      _
    $region41: #{tpu_custom_call.1} parent=1 // pred_fallthru
      _
    // Predicated region
    $region42: #{tpu_custom_call.1} parent=1 // pred_check
      _
    $region43: #{tpu_custom_call.1} parent=1 // pred_check_branch
      %40 = sbr.rel (0) target = $region45
    $region44: #{tpu_custom_call.1} parent=1 // pred_region
      _
    $region45: #{tpu_custom_call.1} parent=1 // pred_fallthru
      _
    %v41 = vld [vmem:[%s0] sm:$0xff]
    %v42 = vld [vmem:[%s0 + $0x8] sm:$0xff]
    %v43 = vld [vmem:[%s1] sm:$0xff]
    %v44 = vld [vmem:[%s1 + $0x8] sm:$0xff]
    %v45 = vld [vmem:[%s2] sm:$0xff]
    %v46 = vld [vmem:[%s2 + $0x8] sm:$0xff]
    %v47 = vld [vmem:[%s2 + $0x10] sm:$0xff]
    %v48 = vld [vmem:[%s2 + $0x18] sm:$0xff]
    %v49 = vld [vmem:[%s3] sm:$0xff]
    %v50 = vld [vmem:[%s3 + $0x8] sm:$0xff]
    %v51 = vld [vmem:[%s3 + $0x10] sm:$0xff]
    %v52 = vld [vmem:[%s3 + $0x18] sm:$0xff]
    %vm53 = vcmask 130048
    %v55 = vsel %vm53, %v49, 0
    %v58 = vsel %vm53, %v50, 0
    %v61 = vsel %vm53, %v51, 0
    %v64 = vsel %vm53, %v52, 0
    %66 = vmatprep.subr.mxu0 0.0
    %67 = vmatpush1.msra.mxu0 %v43
    %68 = vmatprep.subr.mxu0 0.0
    %69 = vmatpush1.msra.mxu0 %v44
    %70 = vmatprep.subr.mxu0 0.0
    %71 = vmatpush1.msra.mxu0 0.0
    %72 = vmatprep.subr.mxu0 0.0
    %73 = vmatpush1.msra.mxu0 0.0
    %74 = vmatprep.subr.mxu0 0.0
    %75 = vmatpush1.msra.mxu0 0.0
    %76 = vmatprep.subr.mxu0 0.0
    %77 = vmatpush1.msra.mxu0 0.0
    %78 = vmatprep.subr.mxu0 0.0
    %79 = vmatpush1.msra.mxu0 0.0
    %80 = vmatprep.subr.mxu0 0.0
    %81 = vmatpush1.msra.mxu0 0.0
    %82 = vmatprep.subr.mxu0 0.0
    %83 = vmatpush1.msra.mxu0 0.0
    %84 = vmatprep.subr.mxu0 0.0
    %85 = vmatpush1.msra.mxu0 0.0
    %86 = vmatprep.subr.mxu0 0.0
    %87 = vmatpush1.msra.mxu0 0.0
    %88 = vmatprep.subr.mxu0 0.0
    %89 = vmatpush1.msra.mxu0 0.0
    %90 = vmatprep.subr.mxu0 0.0
    %91 = vmatpush1.msra.mxu0 0.0
    %92 = vmatprep.subr.mxu0 0.0
    %93 = vmatpush1.msra.mxu0 0.0
    %94 = vmatprep.subr.mxu0 0.0
    %95 = vmatpush1.msra.mxu0 0.0
    %96 = vmatprep.subr.mxu0 0.0
    %97 = vmatpush1.msra.mxu0 0.0
    %98 = vmatprep.subr.mxu0 0.0
    %99 = vmatpush1.msra.mxu0 0.0
    %100 = vmatprep.subr.mxu0 0.0
    %101 = vmatpush1.msra.mxu0 0.0
    %102 = vmatprep.subr.mxu0 0.0
    %103 = vmatpush1.msra.mxu0 0.0
    %104 = vmatprep.subr.mxu0 0.0
    %105 = vmatpush1.msra.mxu0 0.0
    %106 = vmatprep.subr.mxu0 0.0
    %107 = vmatpush1.msra.mxu0 0.0
    %108 = vmatprep.subr.mxu0 0.0
    %109 = vmatpush1.msra.mxu0 0.0
    %110 = vmatprep.subr.mxu0 0.0
    %111 = vmatpush1.msra.mxu0 0.0
    %112 = vmatprep.subr.mxu0 0.0
    %113 = vmatpush1.msra.mxu0 0.0
    %114 = vmatprep.subr.mxu0 0.0
    %115 = vmatpush1.msra.mxu0 0.0
    %116 = vmatprep.subr.mxu0 0.0
    %117 = vmatpush1.msra.mxu0 0.0
    %118 = vmatprep.subr.mxu0 0.0
    %119 = vmatpush1.msra.mxu0 0.0
    %120 = vmatprep.subr.mxu0 0.0
    %121 = vmatpush1.msra.mxu0 0.0
    %122 = vmatprep.subr.mxu0 0.0
    %123 = vmatpush1.msra.mxu0 0.0
    %124 = vmatprep.subr.mxu0 0.0
    %125 = vmatpush1.msra.mxu0 0.0
    %126 = vmatprep.subr.mxu0 0.0
    %127 = vmatpush1.msra.mxu0 0.0
    %128 = vmatprep.subr.mxu0 0.0
    %129 = vmatpush1.msra.mxu0 0.0
    %130 = vmatprep.mubr.f32.mxu0 0.0
    %131 = vmatmul.mubr.f32.gmra.mrb[0].mxu0 %v55
    %v132 = vpop.f32.mrb[0].mxu0
    %v133 = vadd.f32 0.0, %v132
    %v134 = vpop.f32.mrb[0].mxu0
    %135 = vmatprep.mubr.f32.mxu0 0.0
    %136 = vmatmul.mubr.f32.gmra.mrb[0].mxu0 %v58
    %v137 = vpop.f32.mrb[0].mxu0
    %v138 = vadd.f32 0.0, %v137
    %v139 = vpop.f32.mrb[0].mxu0
    %140 = vmatprep.mubr.f32.mxu0 0.0
    %141 = vmatmul.mubr.f32.gmra.mrb[0].mxu0 %v61
    %v142 = vpop.f32.mrb[0].mxu0
    %v143 = vadd.f32 0.0, %v142
    %v144 = vpop.f32.mrb[0].mxu0
    %145 = vmatprep.mubr.f32.mxu0 0.0
    %146 = vmatmul.mubr.f32.gmra.mrb[0].mxu0 %v64
    %v147 = vpop.f32.mrb[0].mxu0
    %v148 = vadd.f32 0.0, %v147
    %v149 = vpop.f32.mrb[0].mxu0
    %150 = vdwg.mxu0
    %v152 = vsel %vm53, %v45, 0
    %v155 = vsel %vm53, %v46, 0
    %v158 = vsel %vm53, %v47, 0
    %v161 = vsel %vm53, %v48, 0
    %163 = vmatprep.subr.mxu0 0.0
    %164 = vmatpush1.msra.mxu0 %v41
    %165 = vmatprep.subr.mxu0 0.0
    %166 = vmatpush1.msra.mxu0 %v42
    %167 = vmatprep.subr.mxu0 0.0
    %168 = vmatpush1.msra.mxu0 0.0
    %169 = vmatprep.subr.mxu0 0.0
    %170 = vmatpush1.msra.mxu0 0.0
    %171 = vmatprep.subr.mxu0 0.0
    %172 = vmatpush1.msra.mxu0 0.0
    %173 = vmatprep.subr.mxu0 0.0
    %174 = vmatpush1.msra.mxu0 0.0
    %175 = vmatprep.subr.mxu0 0.0
    %176 = vmatpush1.msra.mxu0 0.0
    %177 = vmatprep.subr.mxu0 0.0
    %178 = vmatpush1.msra.mxu0 0.0
    %179 = vmatprep.subr.mxu0 0.0
    %180 = vmatpush1.msra.mxu0 0.0
    %181 = vmatprep.subr.mxu0 0.0
    %182 = vmatpush1.msra.mxu0 0.0
    %183 = vmatprep.subr.mxu0 0.0
    %184 = vmatpush1.msra.mxu0 0.0
    %185 = vmatprep.subr.mxu0 0.0
    %186 = vmatpush1.msra.mxu0 0.0
    %187 = vmatprep.subr.mxu0 0.0
    %188 = vmatpush1.msra.mxu0 0.0
    %189 = vmatprep.subr.mxu0 0.0
    %190 = vmatpush1.msra.mxu0 0.0
    %191 = vmatprep.subr.mxu0 0.0
    %192 = vmatpush1.msra.mxu0 0.0
    %193 = vmatprep.subr.mxu0 0.0
    %194 = vmatpush1.msra.mxu0 0.0
    %195 = vmatprep.subr.mxu0 0.0
    %196 = vmatpush1.msra.mxu0 0.0
    %197 = vmatprep.subr.mxu0 0.0
    %198 = vmatpush1.msra.mxu0 0.0
    %199 = vmatprep.subr.mxu0 0.0
    %200 = vmatpush1.msra.mxu0 0.0
    %201 = vmatprep.subr.mxu0 0.0
    %202 = vmatpush1.msra.mxu0 0.0
    %203 = vmatprep.subr.mxu0 0.0
    %204 = vmatpush1.msra.mxu0 0.0
    %205 = vmatprep.subr.mxu0 0.0
    %206 = vmatpush1.msra.mxu0 0.0
    %207 = vmatprep.subr.mxu0 0.0
    %208 = vmatpush1.msra.mxu0 0.0
    %209 = vmatprep.subr.mxu0 0.0
    %210 = vmatpush1.msra.mxu0 0.0
    %211 = vmatprep.subr.mxu0 0.0
    %212 = vmatpush1.msra.mxu0 0.0
    %213 = vmatprep.subr.mxu0 0.0
    %214 = vmatpush1.msra.mxu0 0.0
    %215 = vmatprep.subr.mxu0 0.0
    %216 = vmatpush1.msra.mxu0 0.0
    %217 = vmatprep.subr.mxu0 0.0
    %218 = vmatpush1.msra.mxu0 0.0
    %219 = vmatprep.subr.mxu0 0.0
    %220 = vmatpush1.msra.mxu0 0.0
    %221 = vmatprep.subr.mxu0 0.0
    %222 = vmatpush1.msra.mxu0 0.0
    %223 = vmatprep.subr.mxu0 0.0
    %224 = vmatpush1.msra.mxu0 0.0
    %225 = vmatprep.subr.mxu0 0.0
    %226 = vmatpush1.msra.mxu0 0.0
    %227 = vmatprep.mubr.f32.mxu0 0.0
    %228 = vmatmul.mubr.f32.gmra.mrb[0].mxu0 %v152
    %v229 = vpop.f32.mrb[0].mxu0
    %v230 = vadd.f32 %v133, %v229
    %v231 = vpop.f32.mrb[0].mxu0
    %232 = vmatprep.mubr.f32.mxu0 0.0
    %233 = vmatmul.mubr.f32.gmra.mrb[0].mxu0 %v155
    %v234 = vpop.f32.mrb[0].mxu0
    %v235 = vadd.f32 %v138, %v234
    %v236 = vpop.f32.mrb[0].mxu0
    %237 = vmatprep.mubr.f32.mxu0 0.0
    %238 = vmatmul.mubr.f32.gmra.mrb[0].mxu0 %v158
    %v239 = vpop.f32.mrb[0].mxu0
    %v240 = vadd.f32 %v143, %v239
    %v241 = vpop.f32.mrb[0].mxu0
    %242 = vmatprep.mubr.f32.mxu0 0.0
    %243 = vmatmul.mubr.f32.gmra.mrb[0].mxu0 %v161
    %v244 = vpop.f32.mrb[0].mxu0
    %v245 = vadd.f32 %v148, %v244
    %v246 = vpop.f32.mrb[0].mxu0
    %247 = vdwg.mxu0
    %v248 = vld [vmem:[%s4] sm:$0xff]
    %v249 = vld [vmem:[%s4 + $0x8] sm:$0xff]
    %v250 = vld [vmem:[%s4 + $0x10] sm:$0xff]
    %v251 = vld [vmem:[%s4 + $0x18] sm:$0xff]
    %253 = vset.pattern.permute.xlu0 0
    %254 = vperm.xlu0 %253, %v248
    %v255 = vpop.permute.xlu0 %254
    %258 = vset.pattern.permute.xlu0 0
    %259 = vperm.xlu0 %258, %v249
    %v260 = vpop.permute.xlu0 %259
    %263 = vset.pattern.permute.xlu0 0
    %264 = vperm.xlu0 %263, %v250
    %v265 = vpop.permute.xlu0 %264
    %268 = vset.pattern.permute.xlu0 0
    %269 = vperm.xlu0 %268, %v251
    %v270 = vpop.permute.xlu0 %269
    %v272 = vadd.f32 %v230, %v255
    %v273 = vadd.f32 %v235, %v260
    %v274 = vadd.f32 %v240, %v265
    %v275 = vadd.f32 %v245, %v270
    %v276 = vmax.f32 %v272, 0.0
    %v277 = vmax.f32 %v273, 0.0
    %v278 = vmax.f32 %v274, 0.0
    %v279 = vmax.f32 %v275, 0.0
    %v280 = vld [vmem:[%s5] sm:$0xff]
    %v281 = vld [vmem:[%s5 + $0x8] sm:$0xff]
    %v282 = vld [vmem:[%s6] sm:$0xff]
    %v283 = vld [vmem:[%s6 + $0x8] sm:$0xff]
    %285 = vset.pattern.permute.xlu0 0
    %286 = vperm.xlu0 %285, %v282
    %v287 = vpop.permute.xlu0 %286
    %290 = vset.pattern.permute.xlu0 0
    %291 = vperm.xlu0 %290, %v283
    %v292 = vpop.permute.xlu0 %291
    %vm294 = vcmask 261120
    %v296 = vsel %vm294, %v280, 0
    %v299 = vsel %vm294, %v281, 0
    %301 = vmatprep.subr.mxu0 0.0
    %302 = vmatpush1.msra.mxu0 %v276
    %303 = vmatprep.subr.mxu0 0.0
    %304 = vmatpush1.msra.mxu0 %v277
    %305 = vmatprep.subr.mxu0 0.0
    %306 = vmatpush1.msra.mxu0 %v278
    %307 = vmatprep.subr.mxu0 0.0
    %308 = vmatpush1.msra.mxu0 %v279
    %309 = vmatprep.subr.mxu0 0.0
    %310 = vmatpush1.msra.mxu0 0.0
    %311 = vmatprep.subr.mxu0 0.0
    %312 = vmatpush1.msra.mxu0 0.0
    %313 = vmatprep.subr.mxu0 0.0
    %314 = vmatpush1.msra.mxu0 0.0
    %315 = vmatprep.subr.mxu0 0.0
    %316 = vmatpush1.msra.mxu0 0.0
    %317 = vmatprep.subr.mxu0 0.0
    %318 = vmatpush1.msra.mxu0 0.0
    %319 = vmatprep.subr.mxu0 0.0
    %320 = vmatpush1.msra.mxu0 0.0
    %321 = vmatprep.subr.mxu0 0.0
    %322 = vmatpush1.msra.mxu0 0.0
    %323 = vmatprep.subr.mxu0 0.0
    %324 = vmatpush1.msra.mxu0 0.0
    %325 = vmatprep.subr.mxu0 0.0
    %326 = vmatpush1.msra.mxu0 0.0
    %327 = vmatprep.subr.mxu0 0.0
    %328 = vmatpush1.msra.mxu0 0.0
    %329 = vmatprep.subr.mxu0 0.0
    %330 = vmatpush1.msra.mxu0 0.0
    %331 = vmatprep.subr.mxu0 0.0
    %332 = vmatpush1.msra.mxu0 0.0
    %333 = vmatprep.subr.mxu0 0.0
    %334 = vmatpush1.msra.mxu0 0.0
    %335 = vmatprep.subr.mxu0 0.0
    %336 = vmatpush1.msra.mxu0 0.0
    %337 = vmatprep.subr.mxu0 0.0
    %338 = vmatpush1.msra.mxu0 0.0
    %339 = vmatprep.subr.mxu0 0.0
    %340 = vmatpush1.msra.mxu0 0.0
    %341 = vmatprep.subr.mxu0 0.0
    %342 = vmatpush1.msra.mxu0 0.0
    %343 = vmatprep.subr.mxu0 0.0
    %344 = vmatpush1.msra.mxu0 0.0
    %345 = vmatprep.subr.mxu0 0.0
    %346 = vmatpush1.msra.mxu0 0.0
    %347 = vmatprep.subr.mxu0 0.0
    %348 = vmatpush1.msra.mxu0 0.0
    %349 = vmatprep.subr.mxu0 0.0
    %350 = vmatpush1.msra.mxu0 0.0
    %351 = vmatprep.subr.mxu0 0.0
    %352 = vmatpush1.msra.mxu0 0.0
    %353 = vmatprep.subr.mxu0 0.0
    %354 = vmatpush1.msra.mxu0 0.0
    %355 = vmatprep.subr.mxu0 0.0
    %356 = vmatpush1.msra.mxu0 0.0
    %357 = vmatprep.subr.mxu0 0.0
    %358 = vmatpush1.msra.mxu0 0.0
    %359 = vmatprep.subr.mxu0 0.0
    %360 = vmatpush1.msra.mxu0 0.0
    %361 = vmatprep.subr.mxu0 0.0
    %362 = vmatpush1.msra.mxu0 0.0
    %363 = vmatprep.subr.mxu0 0.0
    %364 = vmatpush1.msra.mxu0 0.0
    %365 = vmatprep.mubr.f32.mxu0 0.0
    %366 = vmatmul.mubr.f32.gmra.mrb[0].mxu0 %v296
    %v367 = vpop.f32.mrb[0].mxu0
    %v368 = vadd.f32 %v287, %v367
    %v369 = vpop.f32.mrb[0].mxu0
    %370 = vmatprep.mubr.f32.mxu0 0.0
    %371 = vmatmul.mubr.f32.gmra.mrb[0].mxu0 %v299
    %v372 = vpop.f32.mrb[0].mxu0
    %v373 = vadd.f32 %v292, %v372
    %v374 = vpop.f32.mrb[0].mxu0
    %375 = vdwg.mxu0
    %v376 = vmax.f32 %v368, 0.0
    %v377 = vmax.f32 %v373, 0.0
    %v378 = vld [vmem:[%s7] sm:$0xff]
    %v379 = vld [vmem:[%s8] sm:$0xff]
    %381 = vset.pattern.permute.xlu0 0
    %382 = vperm.xlu0 %381, %v379
    %v383 = vpop.permute.xlu0 %382
    %v386 = vsel %vm53, %v378, 0
    %388 = vmatprep.subr.mxu0 0.0
    %389 = vmatpush1.msra.mxu0 %v376
    %390 = vmatprep.subr.mxu0 0.0
    %391 = vmatpush1.msra.mxu0 %v377
    %392 = vmatprep.subr.mxu0 0.0
    %393 = vmatpush1.msra.mxu0 0.0
    %394 = vmatprep.subr.mxu0 0.0
    %395 = vmatpush1.msra.mxu0 0.0
    %396 = vmatprep.subr.mxu0 0.0
    %397 = vmatpush1.msra.mxu0 0.0
    %398 = vmatprep.subr.mxu0 0.0
    %399 = vmatpush1.msra.mxu0 0.0
    %400 = vmatprep.subr.mxu0 0.0
    %401 = vmatpush1.msra.mxu0 0.0
    %402 = vmatprep.subr.mxu0 0.0
    %403 = vmatpush1.msra.mxu0 0.0
    %404 = vmatprep.subr.mxu0 0.0
    %405 = vmatpush1.msra.mxu0 0.0
    %406 = vmatprep.subr.mxu0 0.0
    %407 = vmatpush1.msra.mxu0 0.0
    %408 = vmatprep.subr.mxu0 0.0
    %409 = vmatpush1.msra.mxu0 0.0
    %410 = vmatprep.subr.mxu0 0.0
    %411 = vmatpush1.msra.mxu0 0.0
    %412 = vmatprep.subr.mxu0 0.0
    %413 = vmatpush1.msra.mxu0 0.0
    %414 = vmatprep.subr.mxu0 0.0
    %415 = vmatpush1.msra.mxu0 0.0
    %416 = vmatprep.subr.mxu0 0.0
    %417 = vmatpush1.msra.mxu0 0.0
    %418 = vmatprep.subr.mxu0 0.0
    %419 = vmatpush1.msra.mxu0 0.0
    %420 = vmatprep.subr.mxu0 0.0
    %421 = vmatpush1.msra.mxu0 0.0
    %422 = vmatprep.subr.mxu0 0.0
    %423 = vmatpush1.msra.mxu0 0.0
    %424 = vmatprep.subr.mxu0 0.0
    %425 = vmatpush1.msra.mxu0 0.0
    %426 = vmatprep.subr.mxu0 0.0
    %427 = vmatpush1.msra.mxu0 0.0
    %428 = vmatprep.subr.mxu0 0.0
    %429 = vmatpush1.msra.mxu0 0.0
    %430 = vmatprep.subr.mxu0 0.0
    %431 = vmatpush1.msra.mxu0 0.0
    %432 = vmatprep.subr.mxu0 0.0
    %433 = vmatpush1.msra.mxu0 0.0
    %434 = vmatprep.subr.mxu0 0.0
    %435 = vmatpush1.msra.mxu0 0.0
    %436 = vmatprep.subr.mxu0 0.0
    %437 = vmatpush1.msra.mxu0 0.0
    %438 = vmatprep.subr.mxu0 0.0
    %439 = vmatpush1.msra.mxu0 0.0
    %440 = vmatprep.subr.mxu0 0.0
    %441 = vmatpush1.msra.mxu0 0.0
    %442 = vmatprep.subr.mxu0 0.0
    %443 = vmatpush1.msra.mxu0 0.0
    %444 = vmatprep.subr.mxu0 0.0
    %445 = vmatpush1.msra.mxu0 0.0
    %446 = vmatprep.subr.mxu0 0.0
    %447 = vmatpush1.msra.mxu0 0.0
    %448 = vmatprep.subr.mxu0 0.0
    %449 = vmatpush1.msra.mxu0 0.0
    %450 = vmatprep.subr.mxu0 0.0
    %451 = vmatpush1.msra.mxu0 0.0
    %452 = vmatprep.mubr.f32.mxu0 0.0
    %453 = vmatmul.mubr.f32.gmra.mrb[0].mxu0 %v386
    %v454 = vpop.f32.mrb[0].mxu0
    %v455 = vadd.f32 %v383, %v454
    %v456 = vpop.f32.mrb[0].mxu0
    %457 = vdwg.mxu0
    %v458 = vmax.f32 %v455, 0.0
    %v459 = vld [vmem:[%s9] sm:$0xff]
    %461 = vset.pattern.permute.xlu0 0
    %462 = vperm.xlu0 %461, %v459
    %v463 = vpop.permute.xlu0 %462
    %v465 = vmul.f32 %v458, %v463
    %v466 = vrot.slane %v465, 4
    %v467 = vadd.f32 %v465, %v466
    %v468 = vrot.slane %v467, 2
    %v469 = vadd.f32 %v467, %v468
    %v470 = vrot.slane %v469, 1
    %v471 = vadd.f32 %v469, %v470
    %v472 = vld [vmem:[#allocation2] sm:$0x1]
    %474 = vset.pattern.permute.xlu0 0
    %475 = vperm.xlu0 %474, %v472
    %v476 = vpop.permute.xlu0 %475
    %v478 = vlaneseq
    %v479 = vshrl.u32 %v478, 7
    %v480 = vsub.s32 0, %v479
    %v481 = vrot.slane %v476, %v480
    %v482 = vadd.f32 %v471, %v481
    %v483 = vxor.u32 %v482, 2147483648
    %v484 = vmul.f32 %v483, 1.442695
    %v485 = vpow.pop %v484
    %v486 = vadd.f32 %v485, 1.0
    %v487 = vrcp.pop %v486
    %v488 = vmul.f32 1.0, %v487
    %489 = vst [vmem:[#allocation3] sm:$0x1] %v488
    // Predicated region
    $region46: #{tpu_custom_call.1} parent=1 // pred_check
      _
    $region47: #{tpu_custom_call.1} parent=1 // pred_check_branch
      %491 = sbr.rel (0) target = $region49
    $region48: #{tpu_custom_call.1} parent=1 // pred_region
      %s493 = ssub.s32 16, 16
      %494 = vsyncadd [#allocation4], %s493
      %s496 = sshll.u32 [#allocation3], 4
      %s497 = int_to_ptr.vmem [resolvable:$true] %s496
      %499 = dma.vmem_to_hbm [thread:$0]  %s497, 16, %s11, [#allocation4]
    $region49: #{tpu_custom_call.1} parent=1 // pred_fallthru
      _
    // Predicated region
    $region50: #{tpu_custom_call.1} parent=1 // pred_check
      _
    $region51: #{tpu_custom_call.1} parent=1 // pred_check_branch
      %501 = sbr.rel (0) target = $region53
    $region52: #{tpu_custom_call.1} parent=1 // pred_region
      %502 = dma.done [#allocation4], 16
    $region53: #{tpu_custom_call.1} parent=1 // pred_fallthru
      _
    %503 = vsyncpa [#allocation4], 1

</llo_original>
